<compile_context>
chip_gen: v5e
topology: v5e:2x2
jax: 0.10.0
libtpu: 0.0.40
codegen_flags: <defaults>
</compile_context>

<pallas_src>
import jax
import jax.numpy as jnp
from jax.experimental import pallas as pl
from jax.experimental.pallas import tpu as pltpu


def fused_linear_kernel(x_ref, w_ref, b_ref, o_ref):
    # (TILE_B,16) @ (16,16) + (1,16)
    acc = jnp.dot(x_ref[...], w_ref[...], preferred_element_type=jnp.float32)
    o_ref[...] = (acc + b_ref[...]).astype(o_ref.dtype)


def mlp_forward(x, w1, b1, w2, b2, *, tile_b=2048):
    """x: (B,16); w1: (123,16); b1: (123,); w2: (16,123); b2: (16,)."""
    B, d_in = x.shape          # (B, 16)
    d_out = w2.shape[0]        # 16

    # Exact algebraic fusion of the two linear layers (valid: no activation).
    w_fused = w1.T @ w2.T                      # (16, 16)
    b_fused = (b1 @ w2.T + b2).reshape(1, -1)  # (1, 16)

    # Batch tile: large to amortize the ~0.35us/step overhead, bounded so the
    # double-buffered, lane-padded (16->128) f32 footprint stays well under the
    # default scoped VMEM limit on every generation (incl. v7x's 64 MiB VMEM):
    #   2 bufs * (x_tile + out_tile) * 512 B/row  ->  TILE_B=2048 ~= 4 MiB.
    tb = min(tile_b, B)
    if tb != B and tb % 8 != 0:
        tb = max(8, (tb // 8) * 8)  # keep second-to-last block dim 8-aligned
    grid = (pl.cdiv(B, tb),)

    return pl.pallas_call(
        fused_linear_kernel,
        out_shape=jax.ShapeDtypeStruct((B, d_out), x.dtype),
        grid_spec=pltpu.PrefetchScalarGridSpec(
            num_scalar_prefetch=0,
            grid=grid,
            in_specs=[
                # x: tiled over batch, auto double-buffered.
                pl.BlockSpec((tb, d_in), lambda i: (i, 0)),
                # fused weight / bias: VMEM-resident across all grid steps.
                pl.BlockSpec((d_in, d_out), lambda i: (0, 0)),
                pl.BlockSpec((1, d_out), lambda i: (0, 0)),
            ],
            out_specs=pl.BlockSpec((tb, d_out), lambda i: (i, 0)),
        ),
        compiler_params=pltpu.CompilerParams(
            # Purely batch-parallel -> shard grid across TCs on v7x.
            dimension_semantics=("parallel",),
        ),
        cost_estimate=pl.CostEstimate(
            flops=2 * B * d_in * d_out,
            transcendentals=0,
            bytes_accessed=4 * (B * (d_in + d_out) + d_in * d_out + d_out),
        ),
    )(x, w_fused, b_fused)


def init_params(key):
    """Deterministic init mimicking torch.nn.Linear (U(-1/sqrt(fan_in), +1/sqrt(fan_in)))."""
    k1, k2, k3, k4 = jax.random.split(key, 4)
    bound1 = 1.0 / jnp.sqrt(16.0)
    w1 = jax.random.uniform(k1, (123, 16), jnp.float32, -bound1, bound1)
    b1 = jax.random.uniform(k2, (123,), jnp.float32, -bound1, bound1)
    bound2 = 1.0 / jnp.sqrt(123.0)
    w2 = jax.random.uniform(k3, (16, 123), jnp.float32, -bound2, bound2)
    b2 = jax.random.uniform(k4, (16,), jnp.float32, -bound2, bound2)
    return w1, b1, w2, b2


if __name__ == "__main__":
    key = jax.random.PRNGKey(0)
    kx, kx2, kp = jax.random.split(key, 3)
    w1, b1, w2, b2 = init_params(kp)

    # Small case: single block (block shape equals full batch extent).
    B_small = 8
    x_small = jax.random.normal(kx, (B_small, 16), jnp.float32)
    out_small = jax.block_until_ready(mlp_forward(x_small, w1, b1, w2, b2))
    ref_small = (x_small @ w1.T + b1) @ w2.T + b2
    assert out_small.shape == (B_small, 16)
    assert jnp.allclose(out_small, ref_small, atol=1e-4, rtol=1e-4)

    # Larger case: exercises the tiled grid path with a partial last block.
    B_big = 2560
    x_big = jax.random.normal(kx2, (B_big, 16), jnp.float32)
    out_big = jax.block_until_ready(mlp_forward(x_big, w1, b1, w2, b2, tile_b=2048))
    ref_big = (x_big @ w1.T + b1) @ w2.T + b2
    assert out_big.shape == (B_big, 16)
    assert jnp.allclose(out_big, ref_big, atol=1e-4, rtol=1e-4)

    print("KERNEL_OK")
</pallas_src>

<mosaic_0001>
module attributes {stable_mosaic.version = 11 : i64} {
  func.func @fused_linear_kernel(%arg0: i32, %arg1: memref<8x16xf32, #tpu.memory_space<vmem>>, %arg2: memref<16x16xf32, #tpu.memory_space<vmem>>, %arg3: memref<1x16xf32, #tpu.memory_space<vmem>>, %arg4: memref<8x16xf32, #tpu.memory_space<vmem>>) attributes {dimension_semantics = [#tpu.dimension_semantics<parallel>], iteration_bounds = array<i64: 1>, scalar_prefetch = 0 : i64, scratch_operands = 0 : i64, tpu.core_type = #tpu.core_type<tc>, window_params = [{transform_indices = @transform_0, window_bounds = array<i64: 8, 16>}, {pipeline_mode = #tpu.pipeline_mode<synchronous>, transform_indices = @transform_1, window_bounds = array<i64: 16, 16>}, {pipeline_mode = #tpu.pipeline_mode<synchronous>, transform_indices = @transform_2, window_bounds = array<i64: 1, 16>}, {transform_indices = @transform_3, window_bounds = array<i64: 8, 16>}]} {
    %c0 = arith.constant 0 : index
    %c0_0 = arith.constant 0 : index
    %0 = vector.load %arg1[%c0, %c0_0] : memref<8x16xf32, #tpu.memory_space<vmem>>, vector<8x16xf32>
    %c0_1 = arith.constant 0 : index
    %c0_2 = arith.constant 0 : index
    %1 = vector.load %arg2[%c0_1, %c0_2] : memref<16x16xf32, #tpu.memory_space<vmem>>, vector<16x16xf32>
    %cst = arith.constant dense<0.000000e+00> : vector<8x16xf32>
    %2 = tpu.matmul %0, %1, %cst {dimension_numbers = #tpu.dot_dimension_numbers<[1], [0], [0], [1], [0, 0, 1, 1], [], []>} : vector<8x16xf32>, vector<16x16xf32>, vector<8x16xf32> -> vector<8x16xf32>
    %c0_3 = arith.constant 0 : index
    %c0_4 = arith.constant 0 : index
    %3 = vector.load %arg3[%c0_3, %c0_4] : memref<1x16xf32, #tpu.memory_space<vmem>>, vector<1x16xf32>
    %4 = vector.broadcast %3 : vector<1x16xf32> to vector<8x16xf32>
    %5 = arith.addf %2, %4 : vector<8x16xf32>
    %c0_5 = arith.constant 0 : index
    %c0_6 = arith.constant 0 : index
    %6 = vector.load %arg4[%c0_5, %c0_6] : memref<8x16xf32, #tpu.memory_space<vmem>>, vector<8x16xf32>
    tpu.vector_store %arg4[%c0_5, %c0_6], %5 {strides = array<i32>} : memref<8x16xf32, #tpu.memory_space<vmem>>, vector<8x16xf32>,
    return
  }
  func.func @transform_0(%arg0: i32) -> (i32, i32) {
    %c0_i32 = arith.constant 0 : i32
    %c0_i32_0 = arith.constant 0 : i32
    return %arg0, %c0_i32 : i32, i32
  }
  func.func @transform_1(%arg0: i32) -> (i32, i32) {
    %c0_i32 = arith.constant 0 : i32
    %c0_i32_0 = arith.constant 0 : i32
    %c0_i32_1 = arith.constant 0 : i32
    return %c0_i32, %c0_i32_0 : i32, i32
  }
  func.func @transform_2(%arg0: i32) -> (i32, i32) {
    %c0_i32 = arith.constant 0 : i32
    %c0_i32_0 = arith.constant 0 : i32
    %c0_i32_1 = arith.constant 0 : i32
    return %c0_i32, %c0_i32_0 : i32, i32
  }
  func.func @transform_3(%arg0: i32) -> (i32, i32) {
    %c0_i32 = arith.constant 0 : i32
    %c0_i32_0 = arith.constant 0 : i32
    return %arg0, %c0_i32 : i32, i32
  }
}

</mosaic_0001>

<llo_original>
// kernel: tpu_custom_call.1
$region0: #{tpu_custom_call.1}
  #allocation0 [shape = 'u32[]', space=smem, size = 0x4, offset = 0x4, fixed_abs, tag = 'smem constant byte address 0x4 - core index']
  #allocation1 [shape = 'u32[72,128]{1,0:T(1,128)}', space=vmem, size = 0x9000, scoped, tag = 'internal scratch']
  %s0 = inlined_call_operand.hbm [shape: f32[8,16], index: 0, kind: input, shape index: {}]
  %s1 = inlined_call_operand.hbm [shape: f32[16,16], index: 1, kind: input, shape index: {}]
  %s2 = inlined_call_operand.vmem [shape: f32[1,16], index: 2, kind: input, shape index: {}]
  %s3 = inlined_call_operand.hbm [shape: f32[8,16], index: 3, kind: output, shape index: {}]
  %s4 = sld [smem:[#allocation0]]
  $region30: #{tpu_custom_call.1} parent=0
    _
  %s6 = ssub.s32 1, %s4
  %s7 = scalar_select 0, %s6, %s4
  $region1: #{tpu_custom_call.1} parent=0
    #allocation2 [shape = 'u8[4096]{0}', space=vmem, size = 0x1000, scoped, tag = 'input window, operand 0, single buffered']
    #allocation3 [shape = 's32[1]{0}', space=sflag, size = 0x4, scoped, tag = 'scoped memory for tpu_custom_call.1']
    #allocation4 [shape = 's32[1]{0}', space=sflag, size = 0x4, scoped, tag = 'scoped memory for tpu_custom_call.1']
    #allocation5 [shape = 'u8[8192]{0}', space=vmem, size = 0x2000, scoped, tag = 'input window, operand 1, single buffered']
    #allocation6 [shape = 's32[1]{0}', space=sflag, size = 0x4, scoped, tag = 'scoped memory for tpu_custom_call.1']
    #allocation7 [shape = 'u8[4096]{0}', space=vmem, size = 0x1000, scoped, tag = 'output window, operand 0, single buffered']
    %8 = vsyncpa [#allocation3], 0
    %9 = vsyncpa [#allocation6], 0
    %10 = vsyncpa [#allocation4], 0
    // Predicated region
    $region2: #{tpu_custom_call.1} parent=1 // pred_check
      _
    $region3: #{tpu_custom_call.1} parent=1 // pred_check_branch
      %12 = sbr.rel (0) target = $region5
    $region4: #{tpu_custom_call.1} parent=1 // pred_region
      %14 = vsyncadd [#allocation3], 0
      %s16 = sshll.u32 %s0, 4
      %s17 = int_to_ptr.hbm [resolvable:$true] %s16
      %s18 = sshll.u32 [#allocation2], 4
      %s19 = int_to_ptr.vmem [resolvable:$true] %s18
      %21 = dma.hbm_to_vmem [thread:$0]  %s17, 128, %s19, [#allocation3]
    $region5: #{tpu_custom_call.1} parent=1 // pred_fallthru
      _
    // Predicated region
    $region6: #{tpu_custom_call.1} parent=1 // pred_check
      _
    $region7: #{tpu_custom_call.1} parent=1 // pred_check_branch
      %23 = sbr.rel (0) target = $region9
    $region8: #{tpu_custom_call.1} parent=1 // pred_region
      %25 = vsyncadd [#allocation6], 0
      %s26 = sshll.u32 %s1, 4
      %s27 = int_to_ptr.hbm [resolvable:$true] %s26
      %s28 = sshll.u32 [#allocation5], 4
      %s29 = int_to_ptr.vmem [resolvable:$true] %s28
      %34 = dma.hbm_to_vmem [thread:$0]  %s27, 256, %s29, [#allocation6], 128, 128, 8
    $region9: #{tpu_custom_call.1} parent=1 // pred_fallthru
      _
    // Predicated region
    $region10: #{tpu_custom_call.1} parent=1 // pred_check
      _
    $region11: #{tpu_custom_call.1} parent=1 // pred_check_branch
      %36 = sbr.rel (0) target = $region13
    $region12: #{tpu_custom_call.1} parent=1 // pred_region
      _
    $region13: #{tpu_custom_call.1} parent=1 // pred_fallthru
      _
    // Predicated region
    $region14: #{tpu_custom_call.1} parent=1 // pred_check
      _
    $region15: #{tpu_custom_call.1} parent=1 // pred_check_branch
      %38 = sbr.rel (0) target = $region17
    $region16: #{tpu_custom_call.1} parent=1 // pred_region
      %40 = dma.done [#allocation3], 128
    $region17: #{tpu_custom_call.1} parent=1 // pred_fallthru
      _
    // Predicated region
    $region18: #{tpu_custom_call.1} parent=1 // pred_check
      _
    $region19: #{tpu_custom_call.1} parent=1 // pred_check_branch
      %42 = sbr.rel (0) target = $region21
    $region20: #{tpu_custom_call.1} parent=1 // pred_region
      %44 = dma.done [#allocation6], 256
    $region21: #{tpu_custom_call.1} parent=1 // pred_fallthru
      _
    %v45 = vld [vmem:[#allocation2] sm:$0xff]
    %v46 = vld [vmem:[#allocation5] sm:$0xff]
    %v47 = vld [vmem:[#allocation5 + $0x8] sm:$0xff]
    %v48 = vld [vmem:[%s2] sm:$0x1]
    %v50 = vperm.slane %v48, 0
    %vm52 = vcmask 130048
    %v54 = vsel %vm52, %v45, 0
    %56 = vmatpush.msra.mxu0 0.0
    %57 = vmatpush.msra.mxu0 0.0
    %58 = vmatpush.msra.mxu0 0.0
    %59 = vmatpush.msra.mxu0 0.0
    %60 = vmatpush.msra.mxu0 0.0
    %61 = vmatpush.msra.mxu0 0.0
    %62 = vmatpush.msra.mxu0 0.0
    %63 = vmatpush.msra.mxu0 0.0
    %64 = vmatpush.msra.mxu0 0.0
    %65 = vmatpush.msra.mxu0 0.0
    %66 = vmatpush.msra.mxu0 0.0
    %67 = vmatpush.msra.mxu0 0.0
    %68 = vmatpush.msra.mxu0 0.0
    %69 = vmatpush.msra.mxu0 0.0
    %70 = vmatpush.msra.mxu0 %v47
    %71 = vmatpush.msra.mxu0 %v46
    %72 = vmatmul.f32.gmra.mxu0 %v54
    %v73 = vpop.f32.mrf.mxu0
    %v74 = vadd.f32 %v50, %v73
    %75 = vdwg.mxu0
    %76 = vst.msk [vmem:[#allocation7] sm:$0xff] %vm52, %v74
    // Predicated region
    $region22: #{tpu_custom_call.1} parent=1 // pred_check
      _
    $region23: #{tpu_custom_call.1} parent=1 // pred_check_branch
      %78 = sbr.rel (0) target = $region25
    $region24: #{tpu_custom_call.1} parent=1 // pred_region
      %80 = vsyncadd [#allocation4], 0
      %s82 = sshll.u32 [#allocation7], 4
      %s83 = int_to_ptr.vmem [resolvable:$true] %s82
      %s84 = sshll.u32 %s3, 4
      %s85 = int_to_ptr.hbm [resolvable:$true] %s84
      %87 = dma.vmem_to_hbm [thread:$0]  %s83, 128, %s85, [#allocation4]
    $region25: #{tpu_custom_call.1} parent=1 // pred_fallthru
      _
    // Predicated region
    $region26: #{tpu_custom_call.1} parent=1 // pred_check
      _
    $region27: #{tpu_custom_call.1} parent=1 // pred_check_branch
      %89 = sbr.rel (0) target = $region29
    $region28: #{tpu_custom_call.1} parent=1 // pred_region
      %91 = dma.done [#allocation4], 128
    $region29: #{tpu_custom_call.1} parent=1 // pred_fallthru
      _
    %92 = vsyncpa [#allocation3], 1
    %93 = vsyncpa [#allocation6], 1
    %94 = vsyncpa [#allocation4], 1

</llo_original>
